<compile_context>
chip_gen: v7x
topology: tpu7x:2x2x1
jax: 0.10.0
libtpu: 0.0.40
codegen_flags: <defaults>
</compile_context>

<pallas_src>
import jax
import jax.numpy as jnp
from jax.experimental import pallas as pl
from jax.experimental.pallas import tpu as pltpu

HIDDEN = 64
NUM_INPUTS = 7   # titanic features; columns 0 (pclass), 1 (sex), 6 (embarked) are categorical
MAX_TB = 512     # batch rows per grid step (multiple of 128; ~130 KiB of f32 activations)


def net_kernel(scal_ref, xt_ref, w1_ref, w23_ref, w4_ref, b_ref, out_ref):
    """scal_ref: SMEM (4,4) f32  rows 0..2 = folded categorical lookups, [3,0] = b4.
       xt_ref:   (NUM_INPUTS, TB)  batch on the lane axis.
       w1_ref:   (HIDDEN, NUM_INPUTS)   w23_ref: (2, HIDDEN, HIDDEN)
       w4_ref:   (1, HIDDEN)            b_ref:   (HIDDEN, 3)  columns b1,b2,b3.
       out_ref:  (1, TB)  lane-dense output block."""
    xt = xt_ref[...]                                   # (NUM_INPUTS, TB) f32

    def lookup(col, srow, vocab):
        # Resolve embedding(idx) @ w + b with VPU selects over pre-folded scalars.
        idx = xt[col:col + 1, :]                       # (1, TB) integer-valued floats
        val = jnp.full_like(idx, scal_ref[srow, vocab - 1])
        for k in range(vocab - 2, -1, -1):
            val = jnp.where(idx == jnp.float32(k), scal_ref[srow, k], val)
        return val                                     # (1, TB)

    v_pcls = lookup(0, 0, 3)
    v_sex = lookup(1, 1, 2)
    v_emb = lookup(6, 2, 4)

    # Single fused replacement of rows 0, 1, 6 (features are rows here).
    row_ids = jax.lax.broadcasted_iota(jnp.int32, xt.shape, 0)
    cat_vals = jnp.where(row_ids == 0, v_pcls,
                         jnp.where(row_ids == 1, v_sex, v_emb))
    is_cat = (row_ids == 0) | (row_ids == 1) | (row_ids == 6)
    h = jnp.where(is_cat, cat_vals, xt)                # (NUM_INPUTS, TB)

    # MLP (batch on lanes): h = relu(W @ h + b); Dropout == identity (eval).
    h = jnp.maximum(jnp.dot(w1_ref[...], h, preferred_element_type=jnp.float32)
                    + b_ref[:, 0:1], 0.0)              # (HIDDEN, TB)
    h = jnp.maximum(jnp.dot(w23_ref[0], h, preferred_element_type=jnp.float32)
                    + b_ref[:, 1:2], 0.0)
    h = jnp.maximum(jnp.dot(w23_ref[1], h, preferred_element_type=jnp.float32)
                    + b_ref[:, 2:3], 0.0)
    # Final layer: (1, HIDDEN) @ (HIDDEN, TB) + b4  ->  (1, TB) lane-dense store.
    out_ref[...] = (jnp.dot(w4_ref[...], h, preferred_element_type=jnp.float32)
                    + scal_ref[3, 0])


def init_params(key):
    """PyTorch-like deterministic init. Linear weights stored as (in, out)."""
    ks = jax.random.split(key, 17)

    def linear(kw, kb, fan_in, fan_out):
        bound = 1.0 / jnp.sqrt(fan_in)
        w = jax.random.uniform(kw, (fan_in, fan_out), jnp.float32, -bound, bound)
        b = jax.random.uniform(kb, (1, fan_out), jnp.float32, -bound, bound)
        return w, b

    params = {}
    params["pcls_tab"] = jax.random.normal(ks[0], (3, 3), jnp.float32)
    params["pcls_w"], params["pcls_b"] = linear(ks[1], ks[2], 3, 1)
    params["sex_tab"] = jax.random.normal(ks[3], (2, 3), jnp.float32)
    params["sex_w"], params["sex_b"] = linear(ks[4], ks[5], 3, 1)
    params["emb_tab"] = jax.random.normal(ks[6], (4, 3), jnp.float32)
    params["emb_w"], params["emb_b"] = linear(ks[7], ks[8], 3, 1)
    params["w1"], params["b1"] = linear(ks[9], ks[10], NUM_INPUTS, HIDDEN)
    params["w2"], params["b2"] = linear(ks[11], ks[12], HIDDEN, HIDDEN)
    params["w3"], params["b3"] = linear(ks[13], ks[14], HIDDEN, HIDDEN)
    params["w4"], params["b4"] = linear(ks[15], ks[16], HIDDEN, 1)
    return params


def _fold_cat(tab, w, b):
    """Embedding table folded through its 1-output projection -> (vocab,) scalars."""
    return (tab @ w + b).reshape(-1)


def net_forward(x, p):
    B = x.shape[0]
    TB = B if B <= MAX_TB else MAX_TB          # TB == B or a multiple of 128
    grid = (pl.cdiv(B, TB),)

    # --- host-side (free) parameter repacking -------------------------------
    scal = jnp.zeros((4, 4), jnp.float32)
    scal = scal.at[0, :3].set(_fold_cat(p["pcls_tab"], p["pcls_w"], p["pcls_b"]))
    scal = scal.at[1, :2].set(_fold_cat(p["sex_tab"], p["sex_w"], p["sex_b"]))
    scal = scal.at[2, :4].set(_fold_cat(p["emb_tab"], p["emb_w"], p["emb_b"]))
    scal = scal.at[3, 0].set(p["b4"][0, 0])

    xt = x.T                                         # (NUM_INPUTS, B), batch on lanes
    w1t = p["w1"].T                                  # (HIDDEN, NUM_INPUTS)
    w23 = jnp.stack([p["w2"].T, p["w3"].T])          # (2, HIDDEN, HIDDEN)
    w4t = p["w4"].T                                  # (1, HIDDEN)
    bias = jnp.concatenate([p["b1"].T, p["b2"].T, p["b3"].T], axis=1)  # (HIDDEN, 3)

    out_t = pl.pallas_call(
        net_kernel,
        out_shape=jax.ShapeDtypeStruct((1, B), jnp.float32),
        grid=grid,
        in_specs=[
            pl.BlockSpec(memory_space=pltpu.MemorySpace.SMEM),          # scal
            pl.BlockSpec((NUM_INPUTS, TB), lambda i: (0, i)),           # xT (batch-tiled)
            pl.BlockSpec((HIDDEN, NUM_INPUTS), lambda i: (0, 0)),       # w1ᵀ (resident)
            pl.BlockSpec((2, HIDDEN, HIDDEN), lambda i: (0, 0, 0)),     # w2ᵀ/w3ᵀ (resident)
            pl.BlockSpec((1, HIDDEN), lambda i: (0, 0)),                # w4ᵀ (resident)
            pl.BlockSpec((HIDDEN, 3), lambda i: (0, 0)),                # biases (resident)
        ],
        out_specs=pl.BlockSpec((1, TB), lambda i: (0, i)),
        compiler_params=pltpu.CompilerParams(
            dimension_semantics=("parallel",)),
    )(scal, xt, w1t, w23, w4t, bias)
    return out_t.T                                   # (B, 1)


def net_forward_ref(x, p):
    """Pure-JAX reference mirroring the PyTorch forward (eval mode)."""
    def cat(col, tab, w, b):
        idx = x[:, col].astype(jnp.int32)
        emb = tab[idx]
        return emb @ w + b                        # (B, 1)

    v0 = cat(0, p["pcls_tab"], p["pcls_w"], p["pcls_b"])
    v1 = cat(1, p["sex_tab"], p["sex_w"], p["sex_b"])
    v6 = cat(6, p["emb_tab"], p["emb_w"], p["emb_b"])
    xr = x.at[:, 0].set(v0[:, 0]).at[:, 1].set(v1[:, 0]).at[:, 6].set(v6[:, 0])
    h = jnp.maximum(xr @ p["w1"] + p["b1"], 0.0)
    h = jnp.maximum(h @ p["w2"] + p["b2"], 0.0)
    h = jnp.maximum(h @ p["w3"] + p["b3"], 0.0)
    return h @ p["w4"] + p["b4"]


if __name__ == "__main__":
    key = jax.random.PRNGKey(0)
    k_param, k_feat, k_pcls, k_sex, k_emb = jax.random.split(key, 5)

    B = 8
    params = init_params(k_param)

    # continuous features, then overwrite categorical columns with valid indices
    x = jax.random.uniform(k_feat, (B, NUM_INPUTS), jnp.float32)
    x = x.at[:, 0].set(jax.random.randint(k_pcls, (B,), 0, 3).astype(jnp.float32))
    x = x.at[:, 1].set(jax.random.randint(k_sex, (B,), 0, 2).astype(jnp.float32))
    x = x.at[:, 6].set(jax.random.randint(k_emb, (B,), 0, 4).astype(jnp.float32))

    out = jax.block_until_ready(net_forward(x, params))
    ref = jax.block_until_ready(net_forward_ref(x, params))

    assert out.shape == (B, 1), out.shape
    assert jnp.allclose(out, ref, atol=1e-4, rtol=1e-4), (out, ref)
    print("KERNEL_OK")
</pallas_src>

<mosaic_0001>
module attributes {stable_mosaic.version = 11 : i64} {
  func.func @net_kernel(%arg0: i32, %arg1: memref<4x4xf32, #tpu.memory_space<smem>>, %arg2: memref<7x8xf32, #tpu.memory_space<vmem>>, %arg3: memref<64x7xf32, #tpu.memory_space<vmem>>, %arg4: memref<2x64x64xf32, #tpu.memory_space<vmem>>, %arg5: memref<1x64xf32, #tpu.memory_space<vmem>>, %arg6: memref<64x3xf32, #tpu.memory_space<vmem>>, %arg7: memref<1x8xf32, #tpu.memory_space<vmem>>) attributes {dimension_semantics = [#tpu.dimension_semantics<parallel>], iteration_bounds = array<i64: 1>, scalar_prefetch = 0 : i64, scratch_operands = 0 : i64, tpu.core_type = #tpu.core_type<tc>, window_params = [{transform_indices = @transform_0, window_bounds = array<i64: 4, 4>}, {transform_indices = @transform_1, window_bounds = array<i64: 7, 8>}, {pipeline_mode = #tpu.pipeline_mode<synchronous>, transform_indices = @transform_2, window_bounds = array<i64: 64, 7>}, {pipeline_mode = #tpu.pipeline_mode<synchronous>, transform_indices = @transform_3, window_bounds = array<i64: 2, 64, 64>}, {pipeline_mode = #tpu.pipeline_mode<synchronous>, transform_indices = @transform_4, window_bounds = array<i64: 1, 64>}, {pipeline_mode = #tpu.pipeline_mode<synchronous>, transform_indices = @transform_5, window_bounds = array<i64: 64, 3>}, {transform_indices = @transform_6, window_bounds = array<i64: 1, 8>}]} {
    %c0 = arith.constant 0 : index
    %c0_0 = arith.constant 0 : index
    %0 = vector.load %arg2[%c0, %c0_0] : memref<7x8xf32, #tpu.memory_space<vmem>>, vector<7x8xf32>
    %1 = vector.extract_strided_slice %0 {offsets = [0, 0], sizes = [1, 8], strides = [1, 1]} : vector<7x8xf32> to vector<1x8xf32>
    %c0_1 = arith.constant 0 : index
    %c2 = arith.constant 2 : index
    %2 = memref.load %arg1[%c0_1, %c2] : memref<4x4xf32, #tpu.memory_space<smem>>
    %3 = vector.broadcast %2 : f32 to vector<1x8xf32>
    %cst = arith.constant 1.000000e+00 : f32
    %4 = vector.broadcast %cst : f32 to vector<1x8xf32>
    %5 = arith.cmpf oeq, %1, %4 : vector<1x8xf32>
    %c0_2 = arith.constant 0 : index
    %c1 = arith.constant 1 : index
    %6 = memref.load %arg1[%c0_2, %c1] : memref<4x4xf32, #tpu.memory_space<smem>>
    %7 = vector.broadcast %6 : f32 to vector<1x8xf32>
    %8 = arith.select %5, %7, %3 : vector<1x8xi1>, vector<1x8xf32>
    %cst_3 = arith.constant 0.000000e+00 : f32
    %9 = vector.broadcast %cst_3 : f32 to vector<1x8xf32>
    %10 = arith.cmpf oeq, %1, %9 : vector<1x8xf32>
    %c0_4 = arith.constant 0 : index
    %c0_5 = arith.constant 0 : index
    %11 = memref.load %arg1[%c0_4, %c0_5] : memref<4x4xf32, #tpu.memory_space<smem>>
    %12 = vector.broadcast %11 : f32 to vector<1x8xf32>
    %13 = arith.select %10, %12, %8 : vector<1x8xi1>, vector<1x8xf32>
    %14 = vector.extract_strided_slice %0 {offsets = [1, 0], sizes = [1, 8], strides = [1, 1]} : vector<7x8xf32> to vector<1x8xf32>
    %c1_6 = arith.constant 1 : index
    %c1_7 = arith.constant 1 : index
    %15 = memref.load %arg1[%c1_6, %c1_7] : memref<4x4xf32, #tpu.memory_space<smem>>
    %16 = vector.broadcast %15 : f32 to vector<1x8xf32>
    %cst_8 = arith.constant 0.000000e+00 : f32
    %17 = vector.broadcast %cst_8 : f32 to vector<1x8xf32>
    %18 = arith.cmpf oeq, %14, %17 : vector<1x8xf32>
    %c1_9 = arith.constant 1 : index
    %c0_10 = arith.constant 0 : index
    %19 = memref.load %arg1[%c1_9, %c0_10] : memref<4x4xf32, #tpu.memory_space<smem>>
    %20 = vector.broadcast %19 : f32 to vector<1x8xf32>
    %21 = arith.select %18, %20, %16 : vector<1x8xi1>, vector<1x8xf32>
    %22 = vector.extract_strided_slice %0 {offsets = [6, 0], sizes = [1, 8], strides = [1, 1]} : vector<7x8xf32> to vector<1x8xf32>
    %c2_11 = arith.constant 2 : index
    %c3 = arith.constant 3 : index
    %23 = memref.load %arg1[%c2_11, %c3] : memref<4x4xf32, #tpu.memory_space<smem>>
    %24 = vector.broadcast %23 : f32 to vector<1x8xf32>
    %cst_12 = arith.constant 2.000000e+00 : f32
    %25 = vector.broadcast %cst_12 : f32 to vector<1x8xf32>
    %26 = arith.cmpf oeq, %22, %25 : vector<1x8xf32>
    %c2_13 = arith.constant 2 : index
    %c2_14 = arith.constant 2 : index
    %27 = memref.load %arg1[%c2_13, %c2_14] : memref<4x4xf32, #tpu.memory_space<smem>>
    %28 = vector.broadcast %27 : f32 to vector<1x8xf32>
    %29 = arith.select %26, %28, %24 : vector<1x8xi1>, vector<1x8xf32>
    %cst_15 = arith.constant 1.000000e+00 : f32
    %30 = vector.broadcast %cst_15 : f32 to vector<1x8xf32>
    %31 = arith.cmpf oeq, %22, %30 : vector<1x8xf32>
    %c2_16 = arith.constant 2 : index
    %c1_17 = arith.constant 1 : index
    %32 = memref.load %arg1[%c2_16, %c1_17] : memref<4x4xf32, #tpu.memory_space<smem>>
    %33 = vector.broadcast %32 : f32 to vector<1x8xf32>
    %34 = arith.select %31, %33, %29 : vector<1x8xi1>, vector<1x8xf32>
    %cst_18 = arith.constant 0.000000e+00 : f32
    %35 = vector.broadcast %cst_18 : f32 to vector<1x8xf32>
    %36 = arith.cmpf oeq, %22, %35 : vector<1x8xf32>
    %c2_19 = arith.constant 2 : index
    %c0_20 = arith.constant 0 : index
    %37 = memref.load %arg1[%c2_19, %c0_20] : memref<4x4xf32, #tpu.memory_space<smem>>
    %38 = vector.broadcast %37 : f32 to vector<1x8xf32>
    %39 = arith.select %36, %38, %34 : vector<1x8xi1>, vector<1x8xf32>
    %40 = tpu.iota {dimensions = array<i32: 0>} : vector<7x8xi32>
    %c0_i32 = arith.constant 0 : i32
    %41 = vector.broadcast %c0_i32 : i32 to vector<7x8xi32>
    %42 = arith.cmpi eq, %40, %41 : vector<7x8xi32>
    %c1_i32 = arith.constant 1 : i32
    %43 = vector.broadcast %c1_i32 : i32 to vector<7x8xi32>
    %44 = arith.cmpi eq, %40, %43 : vector<7x8xi32>
    %45 = vector.shape_cast %21 : vector<1x8xf32> to vector<1x8xf32>
    %46 = vector.broadcast %45 : vector<1x8xf32> to vector<7x8xf32>
    %47 = vector.shape_cast %39 : vector<1x8xf32> to vector<1x8xf32>
    %48 = vector.broadcast %47 : vector<1x8xf32> to vector<7x8xf32>
    %49 = arith.select %44, %46, %48 : vector<7x8xi1>, vector<7x8xf32>
    %50 = vector.shape_cast %13 : vector<1x8xf32> to vector<1x8xf32>
    %51 = vector.broadcast %50 : vector<1x8xf32> to vector<7x8xf32>
    %52 = arith.select %42, %51, %49 : vector<7x8xi1>, vector<7x8xf32>
    %c0_i32_21 = arith.constant 0 : i32
    %53 = vector.broadcast %c0_i32_21 : i32 to vector<7x8xi32>
    %54 = arith.cmpi eq, %40, %53 : vector<7x8xi32>
    %c1_i32_22 = arith.constant 1 : i32
    %55 = vector.broadcast %c1_i32_22 : i32 to vector<7x8xi32>
    %56 = arith.cmpi eq, %40, %55 : vector<7x8xi32>
    %57 = arith.ori %54, %56 : vector<7x8xi1>
    %c6_i32 = arith.constant 6 : i32
    %58 = vector.broadcast %c6_i32 : i32 to vector<7x8xi32>
    %59 = arith.cmpi eq, %40, %58 : vector<7x8xi32>
    %60 = arith.ori %57, %59 : vector<7x8xi1>
    %61 = arith.select %60, %52, %0 : vector<7x8xi1>, vector<7x8xf32>
    %c0_23 = arith.constant 0 : index
    %c0_24 = arith.constant 0 : index
    %62 = vector.load %arg3[%c0_23, %c0_24] : memref<64x7xf32, #tpu.memory_space<vmem>>, vector<64x7xf32>
    %cst_25 = arith.constant dense<0.000000e+00> : vector<64x8xf32>
    %63 = tpu.matmul %62, %61, %cst_25 {dimension_numbers = #tpu.dot_dimension_numbers<[1], [0], [0], [1], [0, 0, 1, 1], [], []>} : vector<64x7xf32>, vector<7x8xf32>, vector<64x8xf32> -> vector<64x8xf32>
    %c0_26 = arith.constant 0 : index
    %c0_27 = arith.constant 0 : index
    %64 = vector.load %arg6[%c0_26, %c0_27] : memref<64x3xf32, #tpu.memory_space<vmem>>, vector<64x1xf32>
    %65 = vector.broadcast %64 : vector<64x1xf32> to vector<64x8xf32>
    %66 = arith.addf %63, %65 : vector<64x8xf32>
    %cst_28 = arith.constant 0.000000e+00 : f32
    %67 = vector.broadcast %cst_28 : f32 to vector<64x8xf32>
    %68 = arith.maximumf %66, %67 : vector<64x8xf32>
    %c0_29 = arith.constant 0 : index
    %c0_30 = arith.constant 0 : index
    %c0_31 = arith.constant 0 : index
    %69 = vector.load %arg4[%c0_29, %c0_30, %c0_31] : memref<2x64x64xf32, #tpu.memory_space<vmem>>, vector<1x64x64xf32>
    %70 = vector.shape_cast %69 : vector<1x64x64xf32> to vector<64x64xf32>
    %cst_32 = arith.constant dense<0.000000e+00> : vector<64x8xf32>
    %71 = tpu.matmul %70, %68, %cst_32 {dimension_numbers = #tpu.dot_dimension_numbers<[1], [0], [0], [1], [0, 0, 1, 1], [], []>} : vector<64x64xf32>, vector<64x8xf32>, vector<64x8xf32> -> vector<64x8xf32>
    %c0_33 = arith.constant 0 : index
    %c1_34 = arith.constant 1 : index
    %72 = vector.load %arg6[%c0_33, %c1_34] : memref<64x3xf32, #tpu.memory_space<vmem>>, vector<64x1xf32>
    %73 = vector.broadcast %72 : vector<64x1xf32> to vector<64x8xf32>
    %74 = arith.addf %71, %73 : vector<64x8xf32>
    %cst_35 = arith.constant 0.000000e+00 : f32
    %75 = vector.broadcast %cst_35 : f32 to vector<64x8xf32>
    %76 = arith.maximumf %74, %75 : vector<64x8xf32>
    %c1_36 = arith.constant 1 : index
    %c0_37 = arith.constant 0 : index
    %c0_38 = arith.constant 0 : index
    %77 = vector.load %arg4[%c1_36, %c0_37, %c0_38] : memref<2x64x64xf32, #tpu.memory_space<vmem>>, vector<1x64x64xf32>
    %78 = vector.shape_cast %77 : vector<1x64x64xf32> to vector<64x64xf32>
    %cst_39 = arith.constant dense<0.000000e+00> : vector<64x8xf32>
    %79 = tpu.matmul %78, %76, %cst_39 {dimension_numbers = #tpu.dot_dimension_numbers<[1], [0], [0], [1], [0, 0, 1, 1], [], []>} : vector<64x64xf32>, vector<64x8xf32>, vector<64x8xf32> -> vector<64x8xf32>
    %c0_40 = arith.constant 0 : index
    %c2_41 = arith.constant 2 : index
    %80 = vector.load %arg6[%c0_40, %c2_41] : memref<64x3xf32, #tpu.memory_space<vmem>>, vector<64x1xf32>
    %81 = vector.broadcast %80 : vector<64x1xf32> to vector<64x8xf32>
    %82 = arith.addf %79, %81 : vector<64x8xf32>
    %cst_42 = arith.constant 0.000000e+00 : f32
    %83 = vector.broadcast %cst_42 : f32 to vector<64x8xf32>
    %84 = arith.maximumf %82, %83 : vector<64x8xf32>
    %c0_43 = arith.constant 0 : index
    %c0_44 = arith.constant 0 : index
    %85 = vector.load %arg5[%c0_43, %c0_44] : memref<1x64xf32, #tpu.memory_space<vmem>>, vector<1x64xf32>
    %cst_45 = arith.constant dense<0.000000e+00> : vector<1x8xf32>
    %86 = tpu.matmul %85, %84, %cst_45 {dimension_numbers = #tpu.dot_dimension_numbers<[1], [0], [0], [1], [0, 0, 1, 1], [], []>} : vector<1x64xf32>, vector<64x8xf32>, vector<1x8xf32> -> vector<1x8xf32>
    %c3_46 = arith.constant 3 : index
    %c0_47 = arith.constant 0 : index
    %87 = memref.load %arg1[%c3_46, %c0_47] : memref<4x4xf32, #tpu.memory_space<smem>>
    %88 = vector.broadcast %87 : f32 to vector<1x8xf32>
    %89 = arith.addf %86, %88 : vector<1x8xf32>
    %c0_48 = arith.constant 0 : index
    %c0_49 = arith.constant 0 : index
    %90 = vector.load %arg7[%c0_48, %c0_49] : memref<1x8xf32, #tpu.memory_space<vmem>>, vector<1x8xf32>
    tpu.vector_store %arg7[%c0_48, %c0_49], %89 {strides = array<i32>} : memref<1x8xf32, #tpu.memory_space<vmem>>, vector<1x8xf32>,
    return
  }
  func.func @transform_0(%arg0: i32) -> (i32, i32) {
    %c0_i32 = arith.constant 0 : i32
    %c0_i32_0 = arith.constant 0 : i32
    %c0_i32_1 = arith.constant 0 : i32
    return %c0_i32, %c0_i32_0 : i32, i32
  }
  func.func @transform_1(%arg0: i32) -> (i32, i32) {
    %c0_i32 = arith.constant 0 : i32
    %c0_i32_0 = arith.constant 0 : i32
    return %c0_i32, %arg0 : i32, i32
  }
  func.func @transform_2(%arg0: i32) -> (i32, i32) {
    %c0_i32 = arith.constant 0 : i32
    %c0_i32_0 = arith.constant 0 : i32
    %c0_i32_1 = arith.constant 0 : i32
    return %c0_i32, %c0_i32_0 : i32, i32
  }
  func.func @transform_3(%arg0: i32) -> (i32, i32, i32) {
    %c0_i32 = arith.constant 0 : i32
    %c0_i32_0 = arith.constant 0 : i32
    %c0_i32_1 = arith.constant 0 : i32
    %c0_i32_2 = arith.constant 0 : i32
    return %c0_i32, %c0_i32_0, %c0_i32_1 : i32, i32, i32
  }
  func.func @transform_4(%arg0: i32) -> (i32, i32) {
    %c0_i32 = arith.constant 0 : i32
    %c0_i32_0 = arith.constant 0 : i32
    %c0_i32_1 = arith.constant 0 : i32
    return %c0_i32, %c0_i32_0 : i32, i32
  }
  func.func @transform_5(%arg0: i32) -> (i32, i32) {
    %c0_i32 = arith.constant 0 : i32
    %c0_i32_0 = arith.constant 0 : i32
    %c0_i32_1 = arith.constant 0 : i32
    return %c0_i32, %c0_i32_0 : i32, i32
  }
  func.func @transform_6(%arg0: i32) -> (i32, i32) {
    %c0_i32 = arith.constant 0 : i32
    %c0_i32_0 = arith.constant 0 : i32
    return %c0_i32, %arg0 : i32, i32
  }
}

</mosaic_0001>

<llo_original>
// kernel: tpu_custom_call.1
$region0: #{tpu_custom_call.1}
  #allocation0 [shape = 'u32[]', space=smem, size = 0x4, offset = 0x4, fixed_abs, tag = 'smem constant byte address 0x4 - core index']
  #allocation1 [shape = 'u32[144,128]{1,0:T(1,128)}', space=vmem, size = 0x12000, scoped, tag = 'internal scratch']
  %s0 = inlined_call_operand.vmem [shape: f32[4,4], index: 0, kind: input, shape index: {}]
  %s1 = inlined_call_operand.vmem [shape: f32[7,8], index: 1, kind: input, shape index: {}]
  %s2 = inlined_call_operand.vmem [shape: f32[64,7], index: 2, kind: input, shape index: {}]
  %s3 = inlined_call_operand.vmem [shape: f32[2,64,64], index: 3, kind: input, shape index: {}]
  %s4 = inlined_call_operand.vmem [shape: f32[1,64], index: 4, kind: input, shape index: {}]
  %s5 = inlined_call_operand.vmem [shape: f32[64,3], index: 5, kind: input, shape index: {}]
  %s6 = inlined_call_operand.hbm [shape: f32[1,8], index: 6, kind: output, shape index: {}]
  %s7 = sld [smem:[#allocation0]]
  $region38: #{tpu_custom_call.1} parent=0
    _
  %s9 = ssub.s32 1, %s7
  %s10 = scalar_select 0, %s9, %s7
  $region1: #{tpu_custom_call.1} parent=0
    #allocation2 [shape = 'u8[2048]{0}', space=smem, size = 0x800, scoped, tag = 'input window, operand 0, single buffered']
    #allocation3 [shape = 's32[1]{0}', space=sflag, size = 0x4, scoped, tag = 'scoped memory for tpu_custom_call.1']
    #allocation4 [shape = 's32[1]{0}', space=sflag, size = 0x4, scoped, tag = 'scoped memory for tpu_custom_call.1']
    #allocation5 [shape = 'u8[512]{0}', space=vmem, size = 0x400, scoped, tag = 'output window, operand 0, single buffered']
    %11 = vsyncpa [#allocation4], 0
    %12 = vsyncpa [#allocation3], 0
    // Predicated region
    $region2: #{tpu_custom_call.1} parent=1 // pred_check
      _
    $region3: #{tpu_custom_call.1} parent=1 // pred_check_branch
      %14 = sbr.rel (0) target = $region5
    $region4: #{tpu_custom_call.1} parent=1 // pred_region
      %s16 = ssub.s32 64, 64
      %17 = vsyncadd [#allocation4], %s16
      %s19 = sshll.u32 %s0, 4
      %s20 = int_to_ptr.vmem [resolvable:$true] %s19
      %22 = dma.vmem_to_smem %s20, 64, [#allocation2], [#allocation4]
    $region5: #{tpu_custom_call.1} parent=1 // pred_fallthru
      _
    // Predicated region
    $region6: #{tpu_custom_call.1} parent=1 // pred_check
      _
    $region7: #{tpu_custom_call.1} parent=1 // pred_check_branch
      %24 = sbr.rel (0) target = $region9
    $region8: #{tpu_custom_call.1} parent=1 // pred_region
      _
    $region9: #{tpu_custom_call.1} parent=1 // pred_fallthru
      _
    // Predicated region
    $region10: #{tpu_custom_call.1} parent=1 // pred_check
      _
    $region11: #{tpu_custom_call.1} parent=1 // pred_check_branch
      %26 = sbr.rel (0) target = $region13
    $region12: #{tpu_custom_call.1} parent=1 // pred_region
      _
    $region13: #{tpu_custom_call.1} parent=1 // pred_fallthru
      _
    // Predicated region
    $region14: #{tpu_custom_call.1} parent=1 // pred_check
      _
    $region15: #{tpu_custom_call.1} parent=1 // pred_check_branch
      %28 = sbr.rel (0) target = $region17
    $region16: #{tpu_custom_call.1} parent=1 // pred_region
      _
    $region17: #{tpu_custom_call.1} parent=1 // pred_fallthru
      _
    // Predicated region
    $region18: #{tpu_custom_call.1} parent=1 // pred_check
      _
    $region19: #{tpu_custom_call.1} parent=1 // pred_check_branch
      %30 = sbr.rel (0) target = $region21
    $region20: #{tpu_custom_call.1} parent=1 // pred_region
      _
    $region21: #{tpu_custom_call.1} parent=1 // pred_fallthru
      _
    // Predicated region
    $region22: #{tpu_custom_call.1} parent=1 // pred_check
      _
    $region23: #{tpu_custom_call.1} parent=1 // pred_check_branch
      %32 = sbr.rel (0) target = $region25
    $region24: #{tpu_custom_call.1} parent=1 // pred_region
      _
    $region25: #{tpu_custom_call.1} parent=1 // pred_fallthru
      _
    // Predicated region
    $region26: #{tpu_custom_call.1} parent=1 // pred_check
      _
    $region27: #{tpu_custom_call.1} parent=1 // pred_check_branch
      %34 = sbr.rel (0) target = $region29
    $region28: #{tpu_custom_call.1} parent=1 // pred_region
      %35 = dma.done [#allocation4], 64
    $region29: #{tpu_custom_call.1} parent=1 // pred_fallthru
      _
    %36 = sfence
    %v37 = vld [vmem:[%s1] sm:$0x7f]
    %s38 = sld [smem:[#allocation2 + $0x2]]
    %v39 = vstv %s38
    %vm40 = vcmp.eq.f32.partialorder %v37, 1.0
    %s41 = sld [smem:[#allocation2 + $0x1]]
    %v42 = vstv %s41
    %v43 = vsel %vm40, %v42, %v39
    %vm44 = vcmp.eq.f32.partialorder %v37, 0.0
    %s45 = sld [smem:[#allocation2]]
    %v46 = vstv %s45
    %v47 = vsel %vm44, %v46, %v43
    %s48 = sld [smem:[#allocation2 + $0x81]]
    %v49 = vstv %s48
    %s50 = sld [smem:[#allocation2 + $0x80]]
    %v51 = vstv %s50
    %v52 = vsel %vm44, %v51, %v49
    %s53 = sld [smem:[#allocation2 + $0x103]]
    %v54 = vstv %s53
    %vm55 = vcmp.eq.f32.partialorder %v37, 2.0
    %s56 = sld [smem:[#allocation2 + $0x102]]
    %v57 = vstv %s56
    %v58 = vsel %vm55, %v57, %v54
    %s59 = sld [smem:[#allocation2 + $0x101]]
    %v60 = vstv %s59
    %v61 = vsel %vm40, %v60, %v58
    %s62 = sld [smem:[#allocation2 + $0x100]]
    %v63 = vstv %s62
    %v64 = vsel %vm44, %v63, %v61
    %v65 = vlaneseq
    %v66 = vshrl.u32 %v65, 7
    %vm67 = vcmp.eq.s32.totalorder %v66, 0
    %vm68 = vcmp.eq.s32.totalorder %v66, 1
    %v69 = vlaneseq
    %v70 = vshrl.u32 %v69, 7
    %v71 = vsub.s32 1, %v70
    %v72 = vrot.slane %v52, %v71
    %v73 = vlaneseq
    %v74 = vshrl.u32 %v73, 7
    %v75 = vsub.s32 6, %v74
    %v76 = vrot.slane %v64, %v75
    %v77 = vsel %vm68, %v72, %v76
    %v78 = vlaneseq
    %v79 = vshrl.u32 %v78, 7
    %v80 = vsub.s32 0, %v79
    %v81 = vrot.slane %v47, %v80
    %v82 = vsel %vm67, %v81, %v77
    %vm83 = vmor %vm67, %vm68
    %vm84 = vcmp.eq.s32.totalorder %v66, 6
    %vm85 = vmor %vm83, %vm84
    %v86 = vsel %vm85, %v82, %v37
    %v87 = vld [vmem:[%s2] sm:$0xff]
    %v88 = vld [vmem:[%s2 + $0x8] sm:$0xff]
    %v89 = vld [vmem:[%s2 + $0x10] sm:$0xff]
    %v90 = vld [vmem:[%s2 + $0x18] sm:$0xff]
    %v91 = vld [vmem:[%s2 + $0x20] sm:$0xff]
    %v92 = vld [vmem:[%s2 + $0x28] sm:$0xff]
    %v93 = vld [vmem:[%s2 + $0x30] sm:$0xff]
    %v94 = vld [vmem:[%s2 + $0x38] sm:$0xff]
    %v95 = vld [vmem:[%s5] sm:$0xff]
    %v96 = vld [vmem:[%s5 + $0x8] sm:$0xff]
    %v97 = vld [vmem:[%s5 + $0x10] sm:$0xff]
    %v98 = vld [vmem:[%s5 + $0x18] sm:$0xff]
    %v99 = vld [vmem:[%s5 + $0x20] sm:$0xff]
    %v100 = vld [vmem:[%s5 + $0x28] sm:$0xff]
    %v101 = vld [vmem:[%s5 + $0x30] sm:$0xff]
    %v102 = vld [vmem:[%s5 + $0x38] sm:$0xff]
    %104 = vset.pattern.permute.xlu0 0
    %105 = vperm.xlu0 %104, %v95
    %v106 = vpop.permute.xlu0 %105
    %109 = vset.pattern.permute.xlu0 0
    %110 = vperm.xlu0 %109, %v96
    %v111 = vpop.permute.xlu0 %110
    %114 = vset.pattern.permute.xlu0 0
    %115 = vperm.xlu0 %114, %v97
    %v116 = vpop.permute.xlu0 %115
    %119 = vset.pattern.permute.xlu0 0
    %120 = vperm.xlu0 %119, %v98
    %v121 = vpop.permute.xlu0 %120
    %124 = vset.pattern.permute.xlu0 0
    %125 = vperm.xlu0 %124, %v99
    %v126 = vpop.permute.xlu0 %125
    %129 = vset.pattern.permute.xlu0 0
    %130 = vperm.xlu0 %129, %v100
    %v131 = vpop.permute.xlu0 %130
    %134 = vset.pattern.permute.xlu0 0
    %135 = vperm.xlu0 %134, %v101
    %v136 = vpop.permute.xlu0 %135
    %139 = vset.pattern.permute.xlu0 0
    %140 = vperm.xlu0 %139, %v102
    %v141 = vpop.permute.xlu0 %140
    %vm143 = vcmask 56320
    %v145 = vsel %vm143, %v87, 0
    %v148 = vsel %vm143, %v88, 0
    %v151 = vsel %vm143, %v89, 0
    %v154 = vsel %vm143, %v90, 0
    %v157 = vsel %vm143, %v91, 0
    %v160 = vsel %vm143, %v92, 0
    %v163 = vsel %vm143, %v93, 0
    %v166 = vsel %vm143, %v94, 0
    %vm168 = vcmask 1046528
    %v170 = vsel %vm168, %v86, 0
    %172 = vmatprep.subr.mxu0 0.0
    %173 = vmatpush1.msra.mxu0 %v170
    %174 = vmatprep.subr.mxu0 0.0
    %175 = vmatpush1.msra.mxu0 0.0
    %176 = vmatprep.subr.mxu0 0.0
    %177 = vmatpush1.msra.mxu0 0.0
    %178 = vmatprep.subr.mxu0 0.0
    %179 = vmatpush1.msra.mxu0 0.0
    %180 = vmatprep.subr.mxu0 0.0
    %181 = vmatpush1.msra.mxu0 0.0
    %182 = vmatprep.subr.mxu0 0.0
    %183 = vmatpush1.msra.mxu0 0.0
    %184 = vmatprep.subr.mxu0 0.0
    %185 = vmatpush1.msra.mxu0 0.0
    %186 = vmatprep.subr.mxu0 0.0
    %187 = vmatpush1.msra.mxu0 0.0
    %188 = vmatprep.subr.mxu0 0.0
    %189 = vmatpush1.msra.mxu0 0.0
    %190 = vmatprep.subr.mxu0 0.0
    %191 = vmatpush1.msra.mxu0 0.0
    %192 = vmatprep.subr.mxu0 0.0
    %193 = vmatpush1.msra.mxu0 0.0
    %194 = vmatprep.subr.mxu0 0.0
    %195 = vmatpush1.msra.mxu0 0.0
    %196 = vmatprep.subr.mxu0 0.0
    %197 = vmatpush1.msra.mxu0 0.0
    %198 = vmatprep.subr.mxu0 0.0
    %199 = vmatpush1.msra.mxu0 0.0
    %200 = vmatprep.subr.mxu0 0.0
    %201 = vmatpush1.msra.mxu0 0.0
    %202 = vmatprep.subr.mxu0 0.0
    %203 = vmatpush1.msra.mxu0 0.0
    %204 = vmatprep.subr.mxu0 0.0
    %205 = vmatpush1.msra.mxu0 0.0
    %206 = vmatprep.subr.mxu0 0.0
    %207 = vmatpush1.msra.mxu0 0.0
    %208 = vmatprep.subr.mxu0 0.0
    %209 = vmatpush1.msra.mxu0 0.0
    %210 = vmatprep.subr.mxu0 0.0
    %211 = vmatpush1.msra.mxu0 0.0
    %212 = vmatprep.subr.mxu0 0.0
    %213 = vmatpush1.msra.mxu0 0.0
    %214 = vmatprep.subr.mxu0 0.0
    %215 = vmatpush1.msra.mxu0 0.0
    %216 = vmatprep.subr.mxu0 0.0
    %217 = vmatpush1.msra.mxu0 0.0
    %218 = vmatprep.subr.mxu0 0.0
    %219 = vmatpush1.msra.mxu0 0.0
    %220 = vmatprep.subr.mxu0 0.0
    %221 = vmatpush1.msra.mxu0 0.0
    %222 = vmatprep.subr.mxu0 0.0
    %223 = vmatpush1.msra.mxu0 0.0
    %224 = vmatprep.subr.mxu0 0.0
    %225 = vmatpush1.msra.mxu0 0.0
    %226 = vmatprep.subr.mxu0 0.0
    %227 = vmatpush1.msra.mxu0 0.0
    %228 = vmatprep.subr.mxu0 0.0
    %229 = vmatpush1.msra.mxu0 0.0
    %230 = vmatprep.subr.mxu0 0.0
    %231 = vmatpush1.msra.mxu0 0.0
    %232 = vmatprep.subr.mxu0 0.0
    %233 = vmatpush1.msra.mxu0 0.0
    %234 = vmatprep.subr.mxu0 0.0
    %235 = vmatpush1.msra.mxu0 0.0
    %236 = vmatprep.mubr.f32.mxu0 0.0
    %237 = vmatmul.mubr.f32.gmra.mrb[0].mxu0 %v145
    %v238 = vpop.f32.mrb[0].mxu0
    %v239 = vadd.f32 %v106, %v238
    %v240 = vpop.f32.mrb[0].mxu0
    %241 = vmatprep.mubr.f32.mxu0 0.0
    %242 = vmatmul.mubr.f32.gmra.mrb[0].mxu0 %v148
    %v243 = vpop.f32.mrb[0].mxu0
    %v244 = vadd.f32 %v111, %v243
    %v245 = vpop.f32.mrb[0].mxu0
    %246 = vmatprep.mubr.f32.mxu0 0.0
    %247 = vmatmul.mubr.f32.gmra.mrb[0].mxu0 %v151
    %v248 = vpop.f32.mrb[0].mxu0
    %v249 = vadd.f32 %v116, %v248
    %v250 = vpop.f32.mrb[0].mxu0
    %251 = vmatprep.mubr.f32.mxu0 0.0
    %252 = vmatmul.mubr.f32.gmra.mrb[0].mxu0 %v154
    %v253 = vpop.f32.mrb[0].mxu0
    %v254 = vadd.f32 %v121, %v253
    %v255 = vpop.f32.mrb[0].mxu0
    %256 = vmatprep.mubr.f32.mxu0 0.0
    %257 = vmatmul.mubr.f32.gmra.mrb[0].mxu0 %v157
    %v258 = vpop.f32.mrb[0].mxu0
    %v259 = vadd.f32 %v126, %v258
    %v260 = vpop.f32.mrb[0].mxu0
    %261 = vmatprep.mubr.f32.mxu0 0.0
    %262 = vmatmul.mubr.f32.gmra.mrb[0].mxu0 %v160
    %v263 = vpop.f32.mrb[0].mxu0
    %v264 = vadd.f32 %v131, %v263
    %v265 = vpop.f32.mrb[0].mxu0
    %266 = vmatprep.mubr.f32.mxu0 0.0
    %267 = vmatmul.mubr.f32.gmra.mrb[0].mxu0 %v163
    %v268 = vpop.f32.mrb[0].mxu0
    %v269 = vadd.f32 %v136, %v268
    %v270 = vpop.f32.mrb[0].mxu0
    %271 = vmatprep.mubr.f32.mxu0 0.0
    %272 = vmatmul.mubr.f32.gmra.mrb[0].mxu0 %v166
    %v273 = vpop.f32.mrb[0].mxu0
    %v274 = vadd.f32 %v141, %v273
    %v275 = vpop.f32.mrb[0].mxu0
    %276 = vdwg.mxu0
    %v277 = vmax.f32 %v239, 0.0
    %v278 = vmax.f32 %v244, 0.0
    %v279 = vmax.f32 %v249, 0.0
    %v280 = vmax.f32 %v254, 0.0
    %v281 = vmax.f32 %v259, 0.0
    %v282 = vmax.f32 %v264, 0.0
    %v283 = vmax.f32 %v269, 0.0
    %v284 = vmax.f32 %v274, 0.0
    %v285 = vld [vmem:[%s3] sm:$0xff]
    %v286 = vld [vmem:[%s3 + $0x8] sm:$0xff]
    %v287 = vld [vmem:[%s3 + $0x10] sm:$0xff]
    %v288 = vld [vmem:[%s3 + $0x18] sm:$0xff]
    %v289 = vld [vmem:[%s3 + $0x20] sm:$0xff]
    %v290 = vld [vmem:[%s3 + $0x28] sm:$0xff]
    %v291 = vld [vmem:[%s3 + $0x30] sm:$0xff]
    %v292 = vld [vmem:[%s3 + $0x38] sm:$0xff]
    %293 = vset.pattern.permute.xlu0 1
    %294 = vperm.xlu0 %293, %v95
    %v295 = vpop.permute.xlu0 %294
    %297 = vset.pattern.permute.xlu0 1
    %298 = vperm.xlu0 %297, %v96
    %v299 = vpop.permute.xlu0 %298
    %301 = vset.pattern.permute.xlu0 1
    %302 = vperm.xlu0 %301, %v97
    %v303 = vpop.permute.xlu0 %302
    %305 = vset.pattern.permute.xlu0 1
    %306 = vperm.xlu0 %305, %v98
    %v307 = vpop.permute.xlu0 %306
    %309 = vset.pattern.permute.xlu0 1
    %310 = vperm.xlu0 %309, %v99
    %v311 = vpop.permute.xlu0 %310
    %313 = vset.pattern.permute.xlu0 1
    %314 = vperm.xlu0 %313, %v100
    %v315 = vpop.permute.xlu0 %314
    %317 = vset.pattern.permute.xlu0 1
    %318 = vperm.xlu0 %317, %v101
    %v319 = vpop.permute.xlu0 %318
    %321 = vset.pattern.permute.xlu0 1
    %322 = vperm.xlu0 %321, %v102
    %v323 = vpop.permute.xlu0 %322
    %vm325 = vcmask 523264
    %v327 = vsel %vm325, %v285, 0
    %v330 = vsel %vm325, %v286, 0
    %v333 = vsel %vm325, %v287, 0
    %v336 = vsel %vm325, %v288, 0
    %v339 = vsel %vm325, %v289, 0
    %v342 = vsel %vm325, %v290, 0
    %v345 = vsel %vm325, %v291, 0
    %v348 = vsel %vm325, %v292, 0
    %350 = vmatprep.subr.mxu0 0.0
    %351 = vmatpush1.msra.mxu0 %v277
    %352 = vmatprep.subr.mxu0 0.0
    %353 = vmatpush1.msra.mxu0 %v278
    %354 = vmatprep.subr.mxu0 0.0
    %355 = vmatpush1.msra.mxu0 %v279
    %356 = vmatprep.subr.mxu0 0.0
    %357 = vmatpush1.msra.mxu0 %v280
    %358 = vmatprep.subr.mxu0 0.0
    %359 = vmatpush1.msra.mxu0 %v281
    %360 = vmatprep.subr.mxu0 0.0
    %361 = vmatpush1.msra.mxu0 %v282
    %362 = vmatprep.subr.mxu0 0.0
    %363 = vmatpush1.msra.mxu0 %v283
    %364 = vmatprep.subr.mxu0 0.0
    %365 = vmatpush1.msra.mxu0 %v284
    %366 = vmatprep.subr.mxu0 0.0
    %367 = vmatpush1.msra.mxu0 0.0
    %368 = vmatprep.subr.mxu0 0.0
    %369 = vmatpush1.msra.mxu0 0.0
    %370 = vmatprep.subr.mxu0 0.0
    %371 = vmatpush1.msra.mxu0 0.0
    %372 = vmatprep.subr.mxu0 0.0
    %373 = vmatpush1.msra.mxu0 0.0
    %374 = vmatprep.subr.mxu0 0.0
    %375 = vmatpush1.msra.mxu0 0.0
    %376 = vmatprep.subr.mxu0 0.0
    %377 = vmatpush1.msra.mxu0 0.0
    %378 = vmatprep.subr.mxu0 0.0
    %379 = vmatpush1.msra.mxu0 0.0
    %380 = vmatprep.subr.mxu0 0.0
    %381 = vmatpush1.msra.mxu0 0.0
    %382 = vmatprep.subr.mxu0 0.0
    %383 = vmatpush1.msra.mxu0 0.0
    %384 = vmatprep.subr.mxu0 0.0
    %385 = vmatpush1.msra.mxu0 0.0
    %386 = vmatprep.subr.mxu0 0.0
    %387 = vmatpush1.msra.mxu0 0.0
    %388 = vmatprep.subr.mxu0 0.0
    %389 = vmatpush1.msra.mxu0 0.0
    %390 = vmatprep.subr.mxu0 0.0
    %391 = vmatpush1.msra.mxu0 0.0
    %392 = vmatprep.subr.mxu0 0.0
    %393 = vmatpush1.msra.mxu0 0.0
    %394 = vmatprep.subr.mxu0 0.0
    %395 = vmatpush1.msra.mxu0 0.0
    %396 = vmatprep.subr.mxu0 0.0
    %397 = vmatpush1.msra.mxu0 0.0
    %398 = vmatprep.subr.mxu0 0.0
    %399 = vmatpush1.msra.mxu0 0.0
    %400 = vmatprep.subr.mxu0 0.0
    %401 = vmatpush1.msra.mxu0 0.0
    %402 = vmatprep.subr.mxu0 0.0
    %403 = vmatpush1.msra.mxu0 0.0
    %404 = vmatprep.subr.mxu0 0.0
    %405 = vmatpush1.msra.mxu0 0.0
    %406 = vmatprep.subr.mxu0 0.0
    %407 = vmatpush1.msra.mxu0 0.0
    %408 = vmatprep.subr.mxu0 0.0
    %409 = vmatpush1.msra.mxu0 0.0
    %410 = vmatprep.subr.mxu0 0.0
    %411 = vmatpush1.msra.mxu0 0.0
    %412 = vmatprep.subr.mxu0 0.0
    %413 = vmatpush1.msra.mxu0 0.0
    %414 = vmatprep.mubr.f32.mxu0 0.0
    %415 = vmatmul.mubr.f32.gmra.mrb[0].mxu0 %v327
    %v416 = vpop.f32.mrb[0].mxu0
    %v417 = vadd.f32 %v295, %v416
    %v418 = vpop.f32.mrb[0].mxu0
    %419 = vmatprep.mubr.f32.mxu0 0.0
    %420 = vmatmul.mubr.f32.gmra.mrb[0].mxu0 %v330
    %v421 = vpop.f32.mrb[0].mxu0
    %v422 = vadd.f32 %v299, %v421
    %v423 = vpop.f32.mrb[0].mxu0
    %424 = vmatprep.mubr.f32.mxu0 0.0
    %425 = vmatmul.mubr.f32.gmra.mrb[0].mxu0 %v333
    %v426 = vpop.f32.mrb[0].mxu0
    %v427 = vadd.f32 %v303, %v426
    %v428 = vpop.f32.mrb[0].mxu0
    %429 = vmatprep.mubr.f32.mxu0 0.0
    %430 = vmatmul.mubr.f32.gmra.mrb[0].mxu0 %v336
    %v431 = vpop.f32.mrb[0].mxu0
    %v432 = vadd.f32 %v307, %v431
    %v433 = vpop.f32.mrb[0].mxu0
    %434 = vmatprep.mubr.f32.mxu0 0.0
    %435 = vmatmul.mubr.f32.gmra.mrb[0].mxu0 %v339
    %v436 = vpop.f32.mrb[0].mxu0
    %v437 = vadd.f32 %v311, %v436
    %v438 = vpop.f32.mrb[0].mxu0
    %439 = vmatprep.mubr.f32.mxu0 0.0
    %440 = vmatmul.mubr.f32.gmra.mrb[0].mxu0 %v342
    %v441 = vpop.f32.mrb[0].mxu0
    %v442 = vadd.f32 %v315, %v441
    %v443 = vpop.f32.mrb[0].mxu0
    %444 = vmatprep.mubr.f32.mxu0 0.0
    %445 = vmatmul.mubr.f32.gmra.mrb[0].mxu0 %v345
    %v446 = vpop.f32.mrb[0].mxu0
    %v447 = vadd.f32 %v319, %v446
    %v448 = vpop.f32.mrb[0].mxu0
    %449 = vmatprep.mubr.f32.mxu0 0.0
    %450 = vmatmul.mubr.f32.gmra.mrb[0].mxu0 %v348
    %v451 = vpop.f32.mrb[0].mxu0
    %v452 = vadd.f32 %v323, %v451
    %v453 = vpop.f32.mrb[0].mxu0
    %454 = vdwg.mxu0
    %v455 = vmax.f32 %v417, 0.0
    %v456 = vmax.f32 %v422, 0.0
    %v457 = vmax.f32 %v427, 0.0
    %v458 = vmax.f32 %v432, 0.0
    %v459 = vmax.f32 %v437, 0.0
    %v460 = vmax.f32 %v442, 0.0
    %v461 = vmax.f32 %v447, 0.0
    %v462 = vmax.f32 %v452, 0.0
    %s463 = scalar_lea.vmem %s3, 64
    %v464 = vld [vmem:[%s463] sm:$0xff]
    %v465 = vld [vmem:[%s463 + $0x8] sm:$0xff]
    %v466 = vld [vmem:[%s463 + $0x10] sm:$0xff]
    %v467 = vld [vmem:[%s463 + $0x18] sm:$0xff]
    %v468 = vld [vmem:[%s463 + $0x20] sm:$0xff]
    %v469 = vld [vmem:[%s463 + $0x28] sm:$0xff]
    %v470 = vld [vmem:[%s463 + $0x30] sm:$0xff]
    %v471 = vld [vmem:[%s463 + $0x38] sm:$0xff]
    %472 = vset.pattern.permute.xlu0 2
    %473 = vperm.xlu0 %472, %v95
    %v474 = vpop.permute.xlu0 %473
    %476 = vset.pattern.permute.xlu0 2
    %477 = vperm.xlu0 %476, %v96
    %v478 = vpop.permute.xlu0 %477
    %480 = vset.pattern.permute.xlu0 2
    %481 = vperm.xlu0 %480, %v97
    %v482 = vpop.permute.xlu0 %481
    %484 = vset.pattern.permute.xlu0 2
    %485 = vperm.xlu0 %484, %v98
    %v486 = vpop.permute.xlu0 %485
    %488 = vset.pattern.permute.xlu0 2
    %489 = vperm.xlu0 %488, %v99
    %v490 = vpop.permute.xlu0 %489
    %492 = vset.pattern.permute.xlu0 2
    %493 = vperm.xlu0 %492, %v100
    %v494 = vpop.permute.xlu0 %493
    %496 = vset.pattern.permute.xlu0 2
    %497 = vperm.xlu0 %496, %v101
    %v498 = vpop.permute.xlu0 %497
    %500 = vset.pattern.permute.xlu0 2
    %501 = vperm.xlu0 %500, %v102
    %v502 = vpop.permute.xlu0 %501
    %v505 = vsel %vm325, %v464, 0
    %v508 = vsel %vm325, %v465, 0
    %v511 = vsel %vm325, %v466, 0
    %v514 = vsel %vm325, %v467, 0
    %v517 = vsel %vm325, %v468, 0
    %v520 = vsel %vm325, %v469, 0
    %v523 = vsel %vm325, %v470, 0
    %v526 = vsel %vm325, %v471, 0
    %528 = vmatprep.subr.mxu0 0.0
    %529 = vmatpush1.msra.mxu0 %v455
    %530 = vmatprep.subr.mxu0 0.0
    %531 = vmatpush1.msra.mxu0 %v456
    %532 = vmatprep.subr.mxu0 0.0
    %533 = vmatpush1.msra.mxu0 %v457
    %534 = vmatprep.subr.mxu0 0.0
    %535 = vmatpush1.msra.mxu0 %v458
    %536 = vmatprep.subr.mxu0 0.0
    %537 = vmatpush1.msra.mxu0 %v459
    %538 = vmatprep.subr.mxu0 0.0
    %539 = vmatpush1.msra.mxu0 %v460
    %540 = vmatprep.subr.mxu0 0.0
    %541 = vmatpush1.msra.mxu0 %v461
    %542 = vmatprep.subr.mxu0 0.0
    %543 = vmatpush1.msra.mxu0 %v462
    %544 = vmatprep.subr.mxu0 0.0
    %545 = vmatpush1.msra.mxu0 0.0
    %546 = vmatprep.subr.mxu0 0.0
    %547 = vmatpush1.msra.mxu0 0.0
    %548 = vmatprep.subr.mxu0 0.0
    %549 = vmatpush1.msra.mxu0 0.0
    %550 = vmatprep.subr.mxu0 0.0
    %551 = vmatpush1.msra.mxu0 0.0
    %552 = vmatprep.subr.mxu0 0.0
    %553 = vmatpush1.msra.mxu0 0.0
    %554 = vmatprep.subr.mxu0 0.0
    %555 = vmatpush1.msra.mxu0 0.0
    %556 = vmatprep.subr.mxu0 0.0
    %557 = vmatpush1.msra.mxu0 0.0
    %558 = vmatprep.subr.mxu0 0.0
    %559 = vmatpush1.msra.mxu0 0.0
    %560 = vmatprep.subr.mxu0 0.0
    %561 = vmatpush1.msra.mxu0 0.0
    %562 = vmatprep.subr.mxu0 0.0
    %563 = vmatpush1.msra.mxu0 0.0
    %564 = vmatprep.subr.mxu0 0.0
    %565 = vmatpush1.msra.mxu0 0.0
    %566 = vmatprep.subr.mxu0 0.0
    %567 = vmatpush1.msra.mxu0 0.0
    %568 = vmatprep.subr.mxu0 0.0
    %569 = vmatpush1.msra.mxu0 0.0
    %570 = vmatprep.subr.mxu0 0.0
    %571 = vmatpush1.msra.mxu0 0.0
    %572 = vmatprep.subr.mxu0 0.0
    %573 = vmatpush1.msra.mxu0 0.0
    %574 = vmatprep.subr.mxu0 0.0
    %575 = vmatpush1.msra.mxu0 0.0
    %576 = vmatprep.subr.mxu0 0.0
    %577 = vmatpush1.msra.mxu0 0.0
    %578 = vmatprep.subr.mxu0 0.0
    %579 = vmatpush1.msra.mxu0 0.0
    %580 = vmatprep.subr.mxu0 0.0
    %581 = vmatpush1.msra.mxu0 0.0
    %582 = vmatprep.subr.mxu0 0.0
    %583 = vmatpush1.msra.mxu0 0.0
    %584 = vmatprep.subr.mxu0 0.0
    %585 = vmatpush1.msra.mxu0 0.0
    %586 = vmatprep.subr.mxu0 0.0
    %587 = vmatpush1.msra.mxu0 0.0
    %588 = vmatprep.subr.mxu0 0.0
    %589 = vmatpush1.msra.mxu0 0.0
    %590 = vmatprep.subr.mxu0 0.0
    %591 = vmatpush1.msra.mxu0 0.0
    %592 = vmatprep.mubr.f32.mxu0 0.0
    %593 = vmatmul.mubr.f32.gmra.mrb[0].mxu0 %v505
    %v594 = vpop.f32.mrb[0].mxu0
    %v595 = vadd.f32 %v474, %v594
    %v596 = vpop.f32.mrb[0].mxu0
    %597 = vmatprep.mubr.f32.mxu0 0.0
    %598 = vmatmul.mubr.f32.gmra.mrb[0].mxu0 %v508
    %v599 = vpop.f32.mrb[0].mxu0
    %v600 = vadd.f32 %v478, %v599
    %v601 = vpop.f32.mrb[0].mxu0
    %602 = vmatprep.mubr.f32.mxu0 0.0
    %603 = vmatmul.mubr.f32.gmra.mrb[0].mxu0 %v511
    %v604 = vpop.f32.mrb[0].mxu0
    %v605 = vadd.f32 %v482, %v604
    %v606 = vpop.f32.mrb[0].mxu0
    %607 = vmatprep.mubr.f32.mxu0 0.0
    %608 = vmatmul.mubr.f32.gmra.mrb[0].mxu0 %v514
    %v609 = vpop.f32.mrb[0].mxu0
    %v610 = vadd.f32 %v486, %v609
    %v611 = vpop.f32.mrb[0].mxu0
    %612 = vmatprep.mubr.f32.mxu0 0.0
    %613 = vmatmul.mubr.f32.gmra.mrb[0].mxu0 %v517
    %v614 = vpop.f32.mrb[0].mxu0
    %v615 = vadd.f32 %v490, %v614
    %v616 = vpop.f32.mrb[0].mxu0
    %617 = vmatprep.mubr.f32.mxu0 0.0
    %618 = vmatmul.mubr.f32.gmra.mrb[0].mxu0 %v520
    %v619 = vpop.f32.mrb[0].mxu0
    %v620 = vadd.f32 %v494, %v619
    %v621 = vpop.f32.mrb[0].mxu0
    %622 = vmatprep.mubr.f32.mxu0 0.0
    %623 = vmatmul.mubr.f32.gmra.mrb[0].mxu0 %v523
    %v624 = vpop.f32.mrb[0].mxu0
    %v625 = vadd.f32 %v498, %v624
    %v626 = vpop.f32.mrb[0].mxu0
    %627 = vmatprep.mubr.f32.mxu0 0.0
    %628 = vmatmul.mubr.f32.gmra.mrb[0].mxu0 %v526
    %v629 = vpop.f32.mrb[0].mxu0
    %v630 = vadd.f32 %v502, %v629
    %v631 = vpop.f32.mrb[0].mxu0
    %632 = vdwg.mxu0
    %v633 = vmax.f32 %v595, 0.0
    %v634 = vmax.f32 %v600, 0.0
    %v635 = vmax.f32 %v605, 0.0
    %v636 = vmax.f32 %v610, 0.0
    %v637 = vmax.f32 %v615, 0.0
    %v638 = vmax.f32 %v620, 0.0
    %v639 = vmax.f32 %v625, 0.0
    %v640 = vmax.f32 %v630, 0.0
    %v641 = vld [vmem:[%s4] sm:$0x1]
    %s642 = sld [smem:[#allocation2 + $0x180]]
    %v643 = vstv %s642
    %v645 = vsel %vm325, %v641, 0
    %647 = vmatprep.subr.mxu0 0.0
    %648 = vmatpush1.msra.mxu0 %v633
    %649 = vmatprep.subr.mxu0 0.0
    %650 = vmatpush1.msra.mxu0 %v634
    %651 = vmatprep.subr.mxu0 0.0
    %652 = vmatpush1.msra.mxu0 %v635
    %653 = vmatprep.subr.mxu0 0.0
    %654 = vmatpush1.msra.mxu0 %v636
    %655 = vmatprep.subr.mxu0 0.0
    %656 = vmatpush1.msra.mxu0 %v637
    %657 = vmatprep.subr.mxu0 0.0
    %658 = vmatpush1.msra.mxu0 %v638
    %659 = vmatprep.subr.mxu0 0.0
    %660 = vmatpush1.msra.mxu0 %v639
    %661 = vmatprep.subr.mxu0 0.0
    %662 = vmatpush1.msra.mxu0 %v640
    %663 = vmatprep.subr.mxu0 0.0
    %664 = vmatpush1.msra.mxu0 0.0
    %665 = vmatprep.subr.mxu0 0.0
    %666 = vmatpush1.msra.mxu0 0.0
    %667 = vmatprep.subr.mxu0 0.0
    %668 = vmatpush1.msra.mxu0 0.0
    %669 = vmatprep.subr.mxu0 0.0
    %670 = vmatpush1.msra.mxu0 0.0
    %671 = vmatprep.subr.mxu0 0.0
    %672 = vmatpush1.msra.mxu0 0.0
    %673 = vmatprep.subr.mxu0 0.0
    %674 = vmatpush1.msra.mxu0 0.0
    %675 = vmatprep.subr.mxu0 0.0
    %676 = vmatpush1.msra.mxu0 0.0
    %677 = vmatprep.subr.mxu0 0.0
    %678 = vmatpush1.msra.mxu0 0.0
    %679 = vmatprep.subr.mxu0 0.0
    %680 = vmatpush1.msra.mxu0 0.0
    %681 = vmatprep.subr.mxu0 0.0
    %682 = vmatpush1.msra.mxu0 0.0
    %683 = vmatprep.subr.mxu0 0.0
    %684 = vmatpush1.msra.mxu0 0.0
    %685 = vmatprep.subr.mxu0 0.0
    %686 = vmatpush1.msra.mxu0 0.0
    %687 = vmatprep.subr.mxu0 0.0
    %688 = vmatpush1.msra.mxu0 0.0
    %689 = vmatprep.subr.mxu0 0.0
    %690 = vmatpush1.msra.mxu0 0.0
    %691 = vmatprep.subr.mxu0 0.0
    %692 = vmatpush1.msra.mxu0 0.0
    %693 = vmatprep.subr.mxu0 0.0
    %694 = vmatpush1.msra.mxu0 0.0
    %695 = vmatprep.subr.mxu0 0.0
    %696 = vmatpush1.msra.mxu0 0.0
    %697 = vmatprep.subr.mxu0 0.0
    %698 = vmatpush1.msra.mxu0 0.0
    %699 = vmatprep.subr.mxu0 0.0
    %700 = vmatpush1.msra.mxu0 0.0
    %701 = vmatprep.subr.mxu0 0.0
    %702 = vmatpush1.msra.mxu0 0.0
    %703 = vmatprep.subr.mxu0 0.0
    %704 = vmatpush1.msra.mxu0 0.0
    %705 = vmatprep.subr.mxu0 0.0
    %706 = vmatpush1.msra.mxu0 0.0
    %707 = vmatprep.subr.mxu0 0.0
    %708 = vmatpush1.msra.mxu0 0.0
    %709 = vmatprep.subr.mxu0 0.0
    %710 = vmatpush1.msra.mxu0 0.0
    %711 = vmatprep.mubr.f32.mxu0 0.0
    %712 = vmatmul.mubr.f32.gmra.mrb[0].mxu0 %v645
    %v713 = vpop.f32.mrb[0].mxu0
    %v714 = vadd.f32 %v643, %v713
    %v715 = vpop.f32.mrb[0].mxu0
    %716 = vdwg.mxu0
    %vm717 = vcmask 57344
    %718 = vst.msk [vmem:[#allocation5] sm:$0x1] %vm717, %v714
    // Predicated region
    $region30: #{tpu_custom_call.1} parent=1 // pred_check
      _
    $region31: #{tpu_custom_call.1} parent=1 // pred_check_branch
      %720 = sbr.rel (0) target = $region33
    $region32: #{tpu_custom_call.1} parent=1 // pred_region
      %s722 = ssub.s32 16, 16
      %723 = vsyncadd [#allocation3], %s722
      %s725 = sshll.u32 [#allocation5], 4
      %s726 = int_to_ptr.vmem [resolvable:$true] %s725
      %728 = dma.vmem_to_hbm [thread:$0]  %s726, 16, %s6, [#allocation3]
    $region33: #{tpu_custom_call.1} parent=1 // pred_fallthru
      _
    // Predicated region
    $region34: #{tpu_custom_call.1} parent=1 // pred_check
      _
    $region35: #{tpu_custom_call.1} parent=1 // pred_check_branch
      %730 = sbr.rel (0) target = $region37
    $region36: #{tpu_custom_call.1} parent=1 // pred_region
      %731 = dma.done [#allocation3], 16
    $region37: #{tpu_custom_call.1} parent=1 // pred_fallthru
      _
    %732 = vsyncpa [#allocation3], 1
    %733 = vsyncpa [#allocation4], 1

</llo_original>
